<compile_context>
chip_gen: v5e
topology: v5e:2x2
jax: 0.10.0
libtpu: 0.0.40
codegen_flags: <defaults>
</compile_context>

<pallas_src>
import functools

import jax
import jax.numpy as jnp
from jax import lax
from jax.experimental import pallas as pl
from jax.experimental.pallas import tpu as pltpu


# ---------------------------------------------------------------------------
# Fused kernel: key_mlp(context_x), key_mlp(target_x), multihead attention,
# output projection — one grid step per batch element.
# ---------------------------------------------------------------------------
def _fused_multihead_kernel(cx_ref, tx_ref, r_ref,
                            w1_ref, b1_ref, w2_ref, b2_ref,
                            wk_ref, wv_ref, wq_ref, wout_ref,
                            out_ref, att_ref,
                            *, num_heads, d_head, compute_dtype, approx_recip):
    cdt = compute_dtype

    # Hoist weight casts (loaded once per grid step, reused by both MLP passes).
    w1 = w1_ref[...].astype(cdt)          # [x_dim, hidden]
    w2 = w2_ref[...].astype(cdt)          # [hidden, key_size]
    b1 = b1_ref[...]                      # [1, hidden]     (f32)
    b2 = b2_ref[...]                      # [1, key_size]   (f32)

    def key_mlp(x):                       # x: [N, x_dim] f32
        h = jnp.dot(x.astype(cdt), w1, preferred_element_type=jnp.float32) + b1
        h = jnp.maximum(h, 0.0)           # ReLU in f32 (VPU)
        return jnp.dot(h.astype(cdt), w2, preferred_element_type=jnp.float32) + b2

    keys = key_mlp(cx_ref[0])             # [Nc, K]  f32
    qry = key_mlp(tx_ref[0])              # [Nt, K]  f32
    vals = r_ref[0]                       # [Nc, K]  f32

    # All-head projections as lane-dense [*, H*d] matmuls (3 matmuls, not 3*H).
    k_all = jnp.dot(keys.astype(cdt), wk_ref[...].astype(cdt),
                    preferred_element_type=jnp.float32)          # [Nc, H*d]
    v_all = jnp.dot(vals.astype(cdt), wv_ref[...].astype(cdt),
                    preferred_element_type=jnp.float32)          # [Nc, H*d]
    q_all = jnp.dot(qry.astype(cdt), wq_ref[...].astype(cdt),
                    preferred_element_type=jnp.float32)          # [Nt, H*d]
    # Reference scales scores by 1/d_head (not 1/sqrt(d)); fold into q.
    q_all = q_all * (1.0 / float(d_head))

    for h in range(num_heads):            # static unroll over heads
        lo = h * d_head
        hi = lo + d_head
        q_h = q_all[:, lo:hi]             # [Nt, d]
        k_h = k_all[:, lo:hi]             # [Nc, d]
        v_h = v_all[:, lo:hi]             # [Nc, d]

        # scores = q_h @ k_h^T  (contract last dims; no explicit transpose op)
        scores = lax.dot_general(q_h.astype(cdt), k_h.astype(cdt),
                                 (((1,), (1,)), ((), ())),
                                 preferred_element_type=jnp.float32)   # [Nt, Nc]
        scores = scores - jnp.max(scores, axis=-1, keepdims=True)      # XLU reduce
        e = jnp.exp(scores)                                            # EUP
        denom = jnp.sum(e, axis=-1, keepdims=True)
        attn = e * pl.reciprocal(denom, approx=approx_recip)           # [Nt, Nc]

        # Write this head's output directly at its lane offset (no concat).
        att_ref[:, lo:hi] = jnp.dot(attn.astype(cdt), v_h.astype(cdt),
                                    preferred_element_type=jnp.float32)

    # Output projection on the pre-laid-out (Nt, H*d) scratch buffer.
    out_ref[0] = jnp.dot(att_ref[...].astype(cdt), wout_ref[...].astype(cdt),
                         preferred_element_type=jnp.float32)


def multihead_forward(params, context_x, r, target_x, *,
                      compute_dtype=jnp.bfloat16):
    """Full Multihead.forward.  Weights stored as [in, out] (== torch W.T).

    compute_dtype: dtype of MXU operands (accumulation is always f32).
      jnp.bfloat16 -> fast path (full MXU rate on v6e/v7x), approx EUP reciprocal.
      jnp.float32  -> exact-semantics path (matches the f32 reference at 1e-4).
    """
    B, Nc, x_dim = context_x.shape
    _, Nt, _ = target_x.shape
    hidden = params["mlp_w1"].shape[1]
    K = params["mlp_w2"].shape[1]                 # key_size
    H, _, d = params["wk"].shape
    R = params["wout"].shape[1]                   # representation_size (== H*d)

    # Stack per-head projections into lane-dense [in, H*d] matrices so that
    # columns [h*d:(h+1)*d] reproduce head h (matches torch.cat(out, dim=-1)).
    wk_all = jnp.transpose(params["wk"], (1, 0, 2)).reshape(K, H * d)
    wv_all = jnp.transpose(params["wv"], (1, 0, 2)).reshape(K, H * d)
    wq_all = jnp.transpose(params["wq"], (1, 0, 2)).reshape(R, H * d)

    kernel = functools.partial(
        _fused_multihead_kernel,
        num_heads=H, d_head=d, compute_dtype=compute_dtype,
        approx_recip=(compute_dtype != jnp.float32))

    def const2d(shape):
        return pl.BlockSpec(shape, lambda b: (0, 0))

    return pl.pallas_call(
        kernel,
        out_shape=jax.ShapeDtypeStruct((B, Nt, R), jnp.float32),
        grid=(B,),
        in_specs=[
            pl.BlockSpec((1, Nc, x_dim), lambda b: (b, 0, 0)),   # context_x
            pl.BlockSpec((1, Nt, x_dim), lambda b: (b, 0, 0)),   # target_x
            pl.BlockSpec((1, Nc, K), lambda b: (b, 0, 0)),       # r (values)
            const2d((x_dim, hidden)),                            # mlp_w1
            const2d((1, hidden)),                                # mlp_b1
            const2d((hidden, K)),                                # mlp_w2
            const2d((1, K)),                                     # mlp_b2
            const2d((K, H * d)),                                 # wk (stacked)
            const2d((K, H * d)),                                 # wv (stacked)
            const2d((R, H * d)),                                 # wq (stacked)
            const2d((R, R)),                                     # w_out
        ],
        out_specs=pl.BlockSpec((1, Nt, R), lambda b: (b, 0, 0)),
        scratch_shapes=[pltpu.VMEM((Nt, H * d), jnp.float32)],   # head-concat buffer
        compiler_params=pltpu.CompilerParams(
            dimension_semantics=("parallel",),                   # megacore sharding
            vmem_limit_bytes=32 * 1024 * 1024,
        ),
    )(context_x, target_x, r,
      params["mlp_w1"], params["mlp_b1"], params["mlp_w2"], params["mlp_b2"],
      wk_all, wv_all, wq_all, params["wout"])


# ---------------------------------------------------------------------------
# Pure-JAX reference (mirrors the PyTorch module exactly) for verification
# ---------------------------------------------------------------------------
def reference_forward(params, context_x, r, target_x):
    def mlp(x):
        h = jnp.maximum(x @ params["mlp_w1"] + params["mlp_b1"][0], 0.0)
        return h @ params["mlp_w2"] + params["mlp_b2"][0]

    keys = mlp(context_x)
    query = mlp(target_x)
    values = r
    H = params["wk"].shape[0]
    d = params["wk"].shape[2]
    outs = []
    for h in range(H):
        k = keys @ params["wk"][h]
        v = values @ params["wv"][h]
        q = query @ params["wq"][h]
        scores = jnp.einsum("btd,bcd->btc", q, k) / d
        attn = jax.nn.softmax(scores, axis=-1)
        outs.append(jnp.einsum("btc,bcd->btd", attn, v))
    cat = jnp.concatenate(outs, axis=-1)
    return cat @ params["wout"]


if __name__ == "__main__":
    # small, deterministic shapes
    B, Nc, Nt = 2, 8, 8
    x_dim, hidden = 3, 32
    representation_size = 32
    num_heads = 4
    key_size = representation_size               # query = key_mlp(target_x) feeds w_q
    d_head = representation_size // num_heads

    key = jax.random.PRNGKey(0)
    ks = jax.random.split(key, 12)

    # deterministic synthetic parameters (weights stored as [in, out] == torch W.T)
    params = {
        "mlp_w1": 0.2 * jax.random.normal(ks[0], (x_dim, hidden), jnp.float32),
        "mlp_b1": 0.1 * jax.random.normal(ks[1], (1, hidden), jnp.float32),
        "mlp_w2": 0.2 * jax.random.normal(ks[2], (hidden, key_size), jnp.float32),
        "mlp_b2": 0.1 * jax.random.normal(ks[3], (1, key_size), jnp.float32),
        "wk": 0.2 * jax.random.normal(ks[4], (num_heads, key_size, d_head), jnp.float32),
        "wv": 0.2 * jax.random.normal(ks[5], (num_heads, key_size, d_head), jnp.float32),
        "wq": 0.2 * jax.random.normal(ks[6], (num_heads, representation_size, d_head), jnp.float32),
        "wout": 0.2 * jax.random.normal(ks[7], (representation_size, representation_size), jnp.float32),
    }

    context_x = jax.random.normal(ks[8], (B, Nc, x_dim), jnp.float32)
    target_x = jax.random.normal(ks[9], (B, Nt, x_dim), jnp.float32)
    r = jax.random.normal(ks[10], (B, Nc, key_size), jnp.float32)   # values / representation

    ref = reference_forward(params, context_x, r, target_x)

    # Exact-semantics path: f32 MXU operands, exact reciprocal — tight tolerance.
    out_f32 = jax.block_until_ready(
        multihead_forward(params, context_x, r, target_x, compute_dtype=jnp.float32))
    assert out_f32.shape == (B, Nt, representation_size)
    assert jnp.allclose(out_f32, ref, atol=1e-4, rtol=1e-4), "f32 path mismatch vs reference"

    # Fast path: bf16 MXU operands, f32 accumulation, EUP approx reciprocal.
    out_bf16 = jax.block_until_ready(
        multihead_forward(params, context_x, r, target_x, compute_dtype=jnp.bfloat16))
    assert out_bf16.shape == (B, Nt, representation_size)
    assert jnp.allclose(out_bf16, ref, atol=5e-2, rtol=5e-2), "bf16 fast path mismatch vs reference"

    print("KERNEL_OK")
</pallas_src>

<mosaic_0001>
module attributes {stable_mosaic.version = 11 : i64} {
  func.func @_fused_multihead_kernel(%arg0: i32, %arg1: memref<1x8x3xf32, #tpu.memory_space<vmem>>, %arg2: memref<1x8x3xf32, #tpu.memory_space<vmem>>, %arg3: memref<1x8x32xf32, #tpu.memory_space<vmem>>, %arg4: memref<3x32xf32, #tpu.memory_space<vmem>>, %arg5: memref<1x32xf32, #tpu.memory_space<vmem>>, %arg6: memref<32x32xf32, #tpu.memory_space<vmem>>, %arg7: memref<1x32xf32, #tpu.memory_space<vmem>>, %arg8: memref<32x32xf32, #tpu.memory_space<vmem>>, %arg9: memref<32x32xf32, #tpu.memory_space<vmem>>, %arg10: memref<32x32xf32, #tpu.memory_space<vmem>>, %arg11: memref<32x32xf32, #tpu.memory_space<vmem>>, %arg12: memref<1x8x32xf32, #tpu.memory_space<vmem>>, %arg13: memref<8x32xf32, #tpu.memory_space<vmem>>) attributes {dimension_semantics = [#tpu.dimension_semantics<parallel>], iteration_bounds = array<i64: 2>, scalar_prefetch = 0 : i64, scratch_operands = 1 : i64, tpu.core_type = #tpu.core_type<tc>, window_params = [{transform_indices = @transform_0, window_bounds = array<i64: 1, 8, 3>}, {transform_indices = @transform_1, window_bounds = array<i64: 1, 8, 3>}, {transform_indices = @transform_2, window_bounds = array<i64: 1, 8, 32>}, {pipeline_mode = #tpu.pipeline_mode<synchronous>, transform_indices = @transform_3, window_bounds = array<i64: 3, 32>}, {pipeline_mode = #tpu.pipeline_mode<synchronous>, transform_indices = @transform_4, window_bounds = array<i64: 1, 32>}, {pipeline_mode = #tpu.pipeline_mode<synchronous>, transform_indices = @transform_5, window_bounds = array<i64: 32, 32>}, {pipeline_mode = #tpu.pipeline_mode<synchronous>, transform_indices = @transform_6, window_bounds = array<i64: 1, 32>}, {pipeline_mode = #tpu.pipeline_mode<synchronous>, transform_indices = @transform_7, window_bounds = array<i64: 32, 32>}, {pipeline_mode = #tpu.pipeline_mode<synchronous>, transform_indices = @transform_8, window_bounds = array<i64: 32, 32>}, {pipeline_mode = #tpu.pipeline_mode<synchronous>, transform_indices = @transform_9, window_bounds = array<i64: 32, 32>}, {pipeline_mode = #tpu.pipeline_mode<synchronous>, transform_indices = @transform_10, window_bounds = array<i64: 32, 32>}, {transform_indices = @transform_11, window_bounds = array<i64: 1, 8, 32>}]} {
    %c0 = arith.constant 0 : index
    %c0_0 = arith.constant 0 : index
    %0 = vector.load %arg4[%c0, %c0_0] : memref<3x32xf32, #tpu.memory_space<vmem>>, vector<3x32xf32>
    %c0_1 = arith.constant 0 : index
    %c0_2 = arith.constant 0 : index
    %1 = vector.load %arg6[%c0_1, %c0_2] : memref<32x32xf32, #tpu.memory_space<vmem>>, vector<32x32xf32>
    %c0_3 = arith.constant 0 : index
    %c0_4 = arith.constant 0 : index
    %2 = vector.load %arg5[%c0_3, %c0_4] : memref<1x32xf32, #tpu.memory_space<vmem>>, vector<1x32xf32>
    %c0_5 = arith.constant 0 : index
    %c0_6 = arith.constant 0 : index
    %3 = vector.load %arg7[%c0_5, %c0_6] : memref<1x32xf32, #tpu.memory_space<vmem>>, vector<1x32xf32>
    %c0_7 = arith.constant 0 : index
    %c0_8 = arith.constant 0 : index
    %c0_9 = arith.constant 0 : index
    %4 = vector.load %arg1[%c0_7, %c0_8, %c0_9] : memref<1x8x3xf32, #tpu.memory_space<vmem>>, vector<1x8x3xf32>
    %5 = vector.shape_cast %4 : vector<1x8x3xf32> to vector<8x3xf32>
    %cst = arith.constant dense<0.000000e+00> : vector<8x32xf32>
    %6 = tpu.matmul %5, %0, %cst {dimension_numbers = #tpu.dot_dimension_numbers<[1], [0], [0], [1], [0, 0, 1, 1], [], []>} : vector<8x3xf32>, vector<3x32xf32>, vector<8x32xf32> -> vector<8x32xf32>
    %7 = vector.broadcast %2 : vector<1x32xf32> to vector<8x32xf32>
    %8 = arith.addf %6, %7 : vector<8x32xf32>
    %cst_10 = arith.constant 0.000000e+00 : f32
    %9 = vector.broadcast %cst_10 : f32 to vector<8x32xf32>
    %10 = arith.maximumf %8, %9 : vector<8x32xf32>
    %cst_11 = arith.constant dense<0.000000e+00> : vector<8x32xf32>
    %11 = tpu.matmul %10, %1, %cst_11 {dimension_numbers = #tpu.dot_dimension_numbers<[1], [0], [0], [1], [0, 0, 1, 1], [], []>} : vector<8x32xf32>, vector<32x32xf32>, vector<8x32xf32> -> vector<8x32xf32>
    %12 = vector.broadcast %3 : vector<1x32xf32> to vector<8x32xf32>
    %13 = arith.addf %11, %12 : vector<8x32xf32>
    %c0_12 = arith.constant 0 : index
    %c0_13 = arith.constant 0 : index
    %c0_14 = arith.constant 0 : index
    %14 = vector.load %arg2[%c0_12, %c0_13, %c0_14] : memref<1x8x3xf32, #tpu.memory_space<vmem>>, vector<1x8x3xf32>
    %15 = vector.shape_cast %14 : vector<1x8x3xf32> to vector<8x3xf32>
    %cst_15 = arith.constant dense<0.000000e+00> : vector<8x32xf32>
    %16 = tpu.matmul %15, %0, %cst_15 {dimension_numbers = #tpu.dot_dimension_numbers<[1], [0], [0], [1], [0, 0, 1, 1], [], []>} : vector<8x3xf32>, vector<3x32xf32>, vector<8x32xf32> -> vector<8x32xf32>
    %17 = vector.broadcast %2 : vector<1x32xf32> to vector<8x32xf32>
    %18 = arith.addf %16, %17 : vector<8x32xf32>
    %cst_16 = arith.constant 0.000000e+00 : f32
    %19 = vector.broadcast %cst_16 : f32 to vector<8x32xf32>
    %20 = arith.maximumf %18, %19 : vector<8x32xf32>
    %cst_17 = arith.constant dense<0.000000e+00> : vector<8x32xf32>
    %21 = tpu.matmul %20, %1, %cst_17 {dimension_numbers = #tpu.dot_dimension_numbers<[1], [0], [0], [1], [0, 0, 1, 1], [], []>} : vector<8x32xf32>, vector<32x32xf32>, vector<8x32xf32> -> vector<8x32xf32>
    %22 = vector.broadcast %3 : vector<1x32xf32> to vector<8x32xf32>
    %23 = arith.addf %21, %22 : vector<8x32xf32>
    %c0_18 = arith.constant 0 : index
    %c0_19 = arith.constant 0 : index
    %c0_20 = arith.constant 0 : index
    %24 = vector.load %arg3[%c0_18, %c0_19, %c0_20] : memref<1x8x32xf32, #tpu.memory_space<vmem>>, vector<1x8x32xf32>
    %25 = vector.shape_cast %24 : vector<1x8x32xf32> to vector<8x32xf32>
    %c0_21 = arith.constant 0 : index
    %c0_22 = arith.constant 0 : index
    %26 = vector.load %arg8[%c0_21, %c0_22] : memref<32x32xf32, #tpu.memory_space<vmem>>, vector<32x32xf32>
    %cst_23 = arith.constant dense<0.000000e+00> : vector<8x32xf32>
    %27 = tpu.matmul %13, %26, %cst_23 {dimension_numbers = #tpu.dot_dimension_numbers<[1], [0], [0], [1], [0, 0, 1, 1], [], []>} : vector<8x32xf32>, vector<32x32xf32>, vector<8x32xf32> -> vector<8x32xf32>
    %c0_24 = arith.constant 0 : index
    %c0_25 = arith.constant 0 : index
    %28 = vector.load %arg9[%c0_24, %c0_25] : memref<32x32xf32, #tpu.memory_space<vmem>>, vector<32x32xf32>
    %cst_26 = arith.constant dense<0.000000e+00> : vector<8x32xf32>
    %29 = tpu.matmul %25, %28, %cst_26 {dimension_numbers = #tpu.dot_dimension_numbers<[1], [0], [0], [1], [0, 0, 1, 1], [], []>} : vector<8x32xf32>, vector<32x32xf32>, vector<8x32xf32> -> vector<8x32xf32>
    %c0_27 = arith.constant 0 : index
    %c0_28 = arith.constant 0 : index
    %30 = vector.load %arg10[%c0_27, %c0_28] : memref<32x32xf32, #tpu.memory_space<vmem>>, vector<32x32xf32>
    %cst_29 = arith.constant dense<0.000000e+00> : vector<8x32xf32>
    %31 = tpu.matmul %23, %30, %cst_29 {dimension_numbers = #tpu.dot_dimension_numbers<[1], [0], [0], [1], [0, 0, 1, 1], [], []>} : vector<8x32xf32>, vector<32x32xf32>, vector<8x32xf32> -> vector<8x32xf32>
    %cst_30 = arith.constant 1.250000e-01 : f32
    %32 = vector.broadcast %cst_30 : f32 to vector<8x32xf32>
    %33 = arith.mulf %31, %32 : vector<8x32xf32>
    %34 = vector.extract_strided_slice %33 {offsets = [0, 0], sizes = [8, 8], strides = [1, 1]} : vector<8x32xf32> to vector<8x8xf32>
    %35 = vector.extract_strided_slice %27 {offsets = [0, 0], sizes = [8, 8], strides = [1, 1]} : vector<8x32xf32> to vector<8x8xf32>
    %36 = vector.extract_strided_slice %29 {offsets = [0, 0], sizes = [8, 8], strides = [1, 1]} : vector<8x32xf32> to vector<8x8xf32>
    %cst_31 = arith.constant dense<0.000000e+00> : vector<8x8xf32>
    %37 = tpu.matmul %34, %35, %cst_31 {dimension_numbers = #tpu.dot_dimension_numbers<[1], [1], [0], [0], [0, 0, 1, 0], [], []>} : vector<8x8xf32>, vector<8x8xf32>, vector<8x8xf32> -> vector<8x8xf32>
    %cst_32 = arith.constant dense<0xFF800000> : vector<8xf32>
    %38 = vector.multi_reduction <maximumf>, %37, %cst_32 [1] : vector<8x8xf32> to vector<8xf32>
    %39 = vector.shape_cast %38 : vector<8xf32> to vector<8x1xf32>
    %40 = vector.broadcast %39 : vector<8x1xf32> to vector<8x8xf32>
    %41 = arith.subf %37, %40 : vector<8x8xf32>
    %42 = math.exp %41 : vector<8x8xf32>
    %cst_33 = arith.constant dense<0.000000e+00> : vector<8xf32>
    %43 = vector.multi_reduction <add>, %42, %cst_33 [1] : vector<8x8xf32> to vector<8xf32>
    %44 = vector.shape_cast %43 : vector<8xf32> to vector<8x1xf32>
    %45 = tpu.reciprocal %44 : vector<8x1xf32> -> vector<8x1xf32>
    %46 = vector.broadcast %45 : vector<8x1xf32> to vector<8x8xf32>
    %47 = arith.mulf %42, %46 : vector<8x8xf32>
    %cst_34 = arith.constant dense<0.000000e+00> : vector<8x8xf32>
    %48 = tpu.matmul %47, %36, %cst_34 {dimension_numbers = #tpu.dot_dimension_numbers<[1], [0], [0], [1], [0, 0, 1, 1], [], []>} : vector<8x8xf32>, vector<8x8xf32>, vector<8x8xf32> -> vector<8x8xf32>
    %c0_35 = arith.constant 0 : index
    %c0_36 = arith.constant 0 : index
    %49 = vector.load %arg13[%c0_35, %c0_36] : memref<8x32xf32, #tpu.memory_space<vmem>>, vector<8x8xf32>
    tpu.vector_store %arg13[%c0_35, %c0_36], %48 {strides = array<i32>} : memref<8x32xf32, #tpu.memory_space<vmem>>, vector<8x8xf32>,
    %50 = vector.extract_strided_slice %33 {offsets = [0, 8], sizes = [8, 8], strides = [1, 1]} : vector<8x32xf32> to vector<8x8xf32>
    %51 = vector.extract_strided_slice %27 {offsets = [0, 8], sizes = [8, 8], strides = [1, 1]} : vector<8x32xf32> to vector<8x8xf32>
    %52 = vector.extract_strided_slice %29 {offsets = [0, 8], sizes = [8, 8], strides = [1, 1]} : vector<8x32xf32> to vector<8x8xf32>
    %cst_37 = arith.constant dense<0.000000e+00> : vector<8x8xf32>
    %53 = tpu.matmul %50, %51, %cst_37 {dimension_numbers = #tpu.dot_dimension_numbers<[1], [1], [0], [0], [0, 0, 1, 0], [], []>} : vector<8x8xf32>, vector<8x8xf32>, vector<8x8xf32> -> vector<8x8xf32>
    %cst_38 = arith.constant dense<0xFF800000> : vector<8xf32>
    %54 = vector.multi_reduction <maximumf>, %53, %cst_38 [1] : vector<8x8xf32> to vector<8xf32>
    %55 = vector.shape_cast %54 : vector<8xf32> to vector<8x1xf32>
    %56 = vector.broadcast %55 : vector<8x1xf32> to vector<8x8xf32>
    %57 = arith.subf %53, %56 : vector<8x8xf32>
    %58 = math.exp %57 : vector<8x8xf32>
    %cst_39 = arith.constant dense<0.000000e+00> : vector<8xf32>
    %59 = vector.multi_reduction <add>, %58, %cst_39 [1] : vector<8x8xf32> to vector<8xf32>
    %60 = vector.shape_cast %59 : vector<8xf32> to vector<8x1xf32>
    %61 = tpu.reciprocal %60 : vector<8x1xf32> -> vector<8x1xf32>
    %62 = vector.broadcast %61 : vector<8x1xf32> to vector<8x8xf32>
    %63 = arith.mulf %58, %62 : vector<8x8xf32>
    %cst_40 = arith.constant dense<0.000000e+00> : vector<8x8xf32>
    %64 = tpu.matmul %63, %52, %cst_40 {dimension_numbers = #tpu.dot_dimension_numbers<[1], [0], [0], [1], [0, 0, 1, 1], [], []>} : vector<8x8xf32>, vector<8x8xf32>, vector<8x8xf32> -> vector<8x8xf32>
    %c0_41 = arith.constant 0 : index
    %c8 = arith.constant 8 : index
    %65 = vector.load %arg13[%c0_41, %c8] : memref<8x32xf32, #tpu.memory_space<vmem>>, vector<8x8xf32>
    tpu.vector_store %arg13[%c0_41, %c8], %64 {strides = array<i32>} : memref<8x32xf32, #tpu.memory_space<vmem>>, vector<8x8xf32>,
    %66 = vector.extract_strided_slice %33 {offsets = [0, 16], sizes = [8, 8], strides = [1, 1]} : vector<8x32xf32> to vector<8x8xf32>
    %67 = vector.extract_strided_slice %27 {offsets = [0, 16], sizes = [8, 8], strides = [1, 1]} : vector<8x32xf32> to vector<8x8xf32>
    %68 = vector.extract_strided_slice %29 {offsets = [0, 16], sizes = [8, 8], strides = [1, 1]} : vector<8x32xf32> to vector<8x8xf32>
    %cst_42 = arith.constant dense<0.000000e+00> : vector<8x8xf32>
    %69 = tpu.matmul %66, %67, %cst_42 {dimension_numbers = #tpu.dot_dimension_numbers<[1], [1], [0], [0], [0, 0, 1, 0], [], []>} : vector<8x8xf32>, vector<8x8xf32>, vector<8x8xf32> -> vector<8x8xf32>
    %cst_43 = arith.constant dense<0xFF800000> : vector<8xf32>
    %70 = vector.multi_reduction <maximumf>, %69, %cst_43 [1] : vector<8x8xf32> to vector<8xf32>
    %71 = vector.shape_cast %70 : vector<8xf32> to vector<8x1xf32>
    %72 = vector.broadcast %71 : vector<8x1xf32> to vector<8x8xf32>
    %73 = arith.subf %69, %72 : vector<8x8xf32>
    %74 = math.exp %73 : vector<8x8xf32>
    %cst_44 = arith.constant dense<0.000000e+00> : vector<8xf32>
    %75 = vector.multi_reduction <add>, %74, %cst_44 [1] : vector<8x8xf32> to vector<8xf32>
    %76 = vector.shape_cast %75 : vector<8xf32> to vector<8x1xf32>
    %77 = tpu.reciprocal %76 : vector<8x1xf32> -> vector<8x1xf32>
    %78 = vector.broadcast %77 : vector<8x1xf32> to vector<8x8xf32>
    %79 = arith.mulf %74, %78 : vector<8x8xf32>
    %cst_45 = arith.constant dense<0.000000e+00> : vector<8x8xf32>
    %80 = tpu.matmul %79, %68, %cst_45 {dimension_numbers = #tpu.dot_dimension_numbers<[1], [0], [0], [1], [0, 0, 1, 1], [], []>} : vector<8x8xf32>, vector<8x8xf32>, vector<8x8xf32> -> vector<8x8xf32>
    %c0_46 = arith.constant 0 : index
    %c16 = arith.constant 16 : index
    %81 = vector.load %arg13[%c0_46, %c16] : memref<8x32xf32, #tpu.memory_space<vmem>>, vector<8x8xf32>
    tpu.vector_store %arg13[%c0_46, %c16], %80 {strides = array<i32>} : memref<8x32xf32, #tpu.memory_space<vmem>>, vector<8x8xf32>,
    %82 = vector.extract_strided_slice %33 {offsets = [0, 24], sizes = [8, 8], strides = [1, 1]} : vector<8x32xf32> to vector<8x8xf32>
    %83 = vector.extract_strided_slice %27 {offsets = [0, 24], sizes = [8, 8], strides = [1, 1]} : vector<8x32xf32> to vector<8x8xf32>
    %84 = vector.extract_strided_slice %29 {offsets = [0, 24], sizes = [8, 8], strides = [1, 1]} : vector<8x32xf32> to vector<8x8xf32>
    %cst_47 = arith.constant dense<0.000000e+00> : vector<8x8xf32>
    %85 = tpu.matmul %82, %83, %cst_47 {dimension_numbers = #tpu.dot_dimension_numbers<[1], [1], [0], [0], [0, 0, 1, 0], [], []>} : vector<8x8xf32>, vector<8x8xf32>, vector<8x8xf32> -> vector<8x8xf32>
    %cst_48 = arith.constant dense<0xFF800000> : vector<8xf32>
    %86 = vector.multi_reduction <maximumf>, %85, %cst_48 [1] : vector<8x8xf32> to vector<8xf32>
    %87 = vector.shape_cast %86 : vector<8xf32> to vector<8x1xf32>
    %88 = vector.broadcast %87 : vector<8x1xf32> to vector<8x8xf32>
    %89 = arith.subf %85, %88 : vector<8x8xf32>
    %90 = math.exp %89 : vector<8x8xf32>
    %cst_49 = arith.constant dense<0.000000e+00> : vector<8xf32>
    %91 = vector.multi_reduction <add>, %90, %cst_49 [1] : vector<8x8xf32> to vector<8xf32>
    %92 = vector.shape_cast %91 : vector<8xf32> to vector<8x1xf32>
    %93 = tpu.reciprocal %92 : vector<8x1xf32> -> vector<8x1xf32>
    %94 = vector.broadcast %93 : vector<8x1xf32> to vector<8x8xf32>
    %95 = arith.mulf %90, %94 : vector<8x8xf32>
    %cst_50 = arith.constant dense<0.000000e+00> : vector<8x8xf32>
    %96 = tpu.matmul %95, %84, %cst_50 {dimension_numbers = #tpu.dot_dimension_numbers<[1], [0], [0], [1], [0, 0, 1, 1], [], []>} : vector<8x8xf32>, vector<8x8xf32>, vector<8x8xf32> -> vector<8x8xf32>
    %c0_51 = arith.constant 0 : index
    %c24 = arith.constant 24 : index
    %97 = vector.load %arg13[%c0_51, %c24] : memref<8x32xf32, #tpu.memory_space<vmem>>, vector<8x8xf32>
    tpu.vector_store %arg13[%c0_51, %c24], %96 {strides = array<i32>} : memref<8x32xf32, #tpu.memory_space<vmem>>, vector<8x8xf32>,
    %c0_52 = arith.constant 0 : index
    %c0_53 = arith.constant 0 : index
    %98 = vector.load %arg13[%c0_52, %c0_53] : memref<8x32xf32, #tpu.memory_space<vmem>>, vector<8x32xf32>
    %c0_54 = arith.constant 0 : index
    %c0_55 = arith.constant 0 : index
    %99 = vector.load %arg11[%c0_54, %c0_55] : memref<32x32xf32, #tpu.memory_space<vmem>>, vector<32x32xf32>
    %cst_56 = arith.constant dense<0.000000e+00> : vector<8x32xf32>
    %100 = tpu.matmul %98, %99, %cst_56 {dimension_numbers = #tpu.dot_dimension_numbers<[1], [0], [0], [1], [0, 0, 1, 1], [], []>} : vector<8x32xf32>, vector<32x32xf32>, vector<8x32xf32> -> vector<8x32xf32>
    %c0_57 = arith.constant 0 : index
    %c0_58 = arith.constant 0 : index
    %c0_59 = arith.constant 0 : index
    %101 = vector.load %arg12[%c0_57, %c0_58, %c0_59] : memref<1x8x32xf32, #tpu.memory_space<vmem>>, vector<1x8x32xf32>
    %102 = vector.shape_cast %101 : vector<1x8x32xf32> to vector<8x32xf32>
    %103 = vector.shape_cast %100 : vector<8x32xf32> to vector<1x8x32xf32>
    tpu.vector_store %arg12[%c0_57, %c0_58, %c0_59], %103 {strides = array<i32>} : memref<1x8x32xf32, #tpu.memory_space<vmem>>, vector<1x8x32xf32>,
    return
  }
  func.func @transform_0(%arg0: i32) -> (i32, i32, i32) {
    %c0_i32 = arith.constant 0 : i32
    %c0_i32_0 = arith.constant 0 : i32
    %c0_i32_1 = arith.constant 0 : i32
    return %arg0, %c0_i32, %c0_i32_0 : i32, i32, i32
  }
  func.func @transform_1(%arg0: i32) -> (i32, i32, i32) {
    %c0_i32 = arith.constant 0 : i32
    %c0_i32_0 = arith.constant 0 : i32
    %c0_i32_1 = arith.constant 0 : i32
    return %arg0, %c0_i32, %c0_i32_0 : i32, i32, i32
  }
  func.func @transform_2(%arg0: i32) -> (i32, i32, i32) {
    %c0_i32 = arith.constant 0 : i32
    %c0_i32_0 = arith.constant 0 : i32
    %c0_i32_1 = arith.constant 0 : i32
    return %arg0, %c0_i32, %c0_i32_0 : i32, i32, i32
  }
  func.func @transform_3(%arg0: i32) -> (i32, i32) {
    %c0_i32 = arith.constant 0 : i32
    %c0_i32_0 = arith.constant 0 : i32
    %c0_i32_1 = arith.constant 0 : i32
    return %c0_i32, %c0_i32_0 : i32, i32
  }
  func.func @transform_4(%arg0: i32) -> (i32, i32) {
    %c0_i32 = arith.constant 0 : i32
    %c0_i32_0 = arith.constant 0 : i32
    %c0_i32_1 = arith.constant 0 : i32
    return %c0_i32, %c0_i32_0 : i32, i32
  }
  func.func @transform_5(%arg0: i32) -> (i32, i32) {
    %c0_i32 = arith.constant 0 : i32
    %c0_i32_0 = arith.constant 0 : i32
    %c0_i32_1 = arith.constant 0 : i32
    return %c0_i32, %c0_i32_0 : i32, i32
  }
  func.func @transform_6(%arg0: i32) -> (i32, i32) {
    %c0_i32 = arith.constant 0 : i32
    %c0_i32_0 = arith.constant 0 : i32
    %c0_i32_1 = arith.constant 0 : i32
    return %c0_i32, %c0_i32_0 : i32, i32
  }
  func.func @transform_7(%arg0: i32) -> (i32, i32) {
    %c0_i32 = arith.constant 0 : i32
    %c0_i32_0 = arith.constant 0 : i32
    %c0_i32_1 = arith.constant 0 : i32
    return %c0_i32, %c0_i32_0 : i32, i32
  }
  func.func @transform_8(%arg0: i32) -> (i32, i32) {
    %c0_i32 = arith.constant 0 : i32
    %c0_i32_0 = arith.constant 0 : i32
    %c0_i32_1 = arith.constant 0 : i32
    return %c0_i32, %c0_i32_0 : i32, i32
  }
  func.func @transform_9(%arg0: i32) -> (i32, i32) {
    %c0_i32 = arith.constant 0 : i32
    %c0_i32_0 = arith.constant 0 : i32
    %c0_i32_1 = arith.constant 0 : i32
    return %c0_i32, %c0_i32_0 : i32, i32
  }
  func.func @transform_10(%arg0: i32) -> (i32, i32) {
    %c0_i32 = arith.constant 0 : i32
    %c0_i32_0 = arith.constant 0 : i32
    %c0_i32_1 = arith.constant 0 : i32
    return %c0_i32, %c0_i32_0 : i32, i32
  }
  func.func @transform_11(%arg0: i32) -> (i32, i32, i32) {
    %c0_i32 = arith.constant 0 : i32
    %c0_i32_0 = arith.constant 0 : i32
    %c0_i32_1 = arith.constant 0 : i32
    return %arg0, %c0_i32, %c0_i32_0 : i32, i32, i32
  }
}

</mosaic_0001>

<llo_original>
// kernel: tpu_custom_call.1
$region0: #{tpu_custom_call.1}
  #allocation0 [shape = 'u32[]', space=smem, size = 0x4, offset = 0x4, fixed_abs, tag = 'smem constant byte address 0x4 - core index']
  #allocation1 [shape = 'u32[72,128]{1,0:T(1,128)}', space=vmem, size = 0x9000, scoped, tag = 'internal scratch']
  #allocation2 [shape = 'f32[8,32]{1,0:T(8,128)}', space=vmem, size = 0x1000, scoped, tag = 'scratch operand']
  %s0 = inlined_call_operand.vmem [shape: f32[2,8,3], index: 0, kind: input, shape index: {}]
  %s1 = inlined_call_operand.vmem [shape: f32[2,8,3], index: 1, kind: input, shape index: {}]
  %s2 = inlined_call_operand.hbm [shape: f32[2,8,32], index: 2, kind: input, shape index: {}]
  %s3 = inlined_call_operand.vmem [shape: f32[3,32], index: 3, kind: input, shape index: {}]
  %s4 = inlined_call_operand.vmem [shape: f32[1,32], index: 4, kind: input, shape index: {}]
  %s5 = inlined_call_operand.vmem [shape: f32[32,32], index: 5, kind: input, shape index: {}]
  %s6 = inlined_call_operand.vmem [shape: f32[1,32], index: 6, kind: input, shape index: {}]
  %s7 = inlined_call_operand.hbm [shape: f32[32,32], index: 7, kind: input, shape index: {}]
  %s8 = inlined_call_operand.hbm [shape: f32[32,32], index: 8, kind: input, shape index: {}]
  %s9 = inlined_call_operand.hbm [shape: f32[32,32], index: 9, kind: input, shape index: {}]
  %s10 = inlined_call_operand.hbm [shape: f32[32,32], index: 10, kind: input, shape index: {}]
  %s11 = inlined_call_operand.hbm [shape: f32[2,8,32], index: 11, kind: output, shape index: {}]
  %s12 = sld [smem:[#allocation0]]
  $region97: #{tpu_custom_call.1} parent=0
    _
  %s14 = ssub.s32 1, %s12
  %s15 = scalar_select 0, %s14, %s12
  $region1: #{tpu_custom_call.1} parent=0
    #allocation3 [shape = 'u8[8192]{0}', space=vmem, size = 0x2000, scoped, tag = 'input window, operand 2']
    #allocation4 [shape = 's32[2]{0}', space=sflag, size = 0x8, scoped, tag = 'scoped memory for tpu_custom_call.1']
    #allocation5 [shape = 's32[2]{0}', space=sflag, size = 0x8, scoped, tag = 'scoped memory for tpu_custom_call.1']
    #allocation6 [shape = 'u8[16384]{0}', space=vmem, size = 0x4000, scoped, tag = 'input window, operand 7, single buffered']
    #allocation7 [shape = 's32[1]{0}', space=sflag, size = 0x4, scoped, tag = 'scoped memory for tpu_custom_call.1']
    #allocation8 [shape = 'u8[16384]{0}', space=vmem, size = 0x4000, scoped, tag = 'input window, operand 8, single buffered']
    #allocation9 [shape = 'u8[16384]{0}', space=vmem, size = 0x4000, scoped, tag = 'input window, operand 9, single buffered']
    #allocation10 [shape = 's32[1]{0}', space=sflag, size = 0x4, scoped, tag = 'scoped memory for tpu_custom_call.1']
    #allocation11 [shape = 'u8[16384]{0}', space=vmem, size = 0x4000, scoped, tag = 'input window, operand 10, single buffered']
    #allocation12 [shape = 'u8[8192]{0}', space=vmem, size = 0x2000, scoped, tag = 'output window, operand 0']
    %16 = vsyncpa [#allocation4], 0
    %s17 = scalar_lea.sflag [#allocation4], 1
    %18 = vsyncpa %s17, 0
    %19 = vsyncpa [#allocation7], 0
    %20 = vsyncpa [#allocation10], 0
    %21 = vsyncpa [#allocation5], 0
    %s22 = scalar_lea.sflag [#allocation5], 1
    %23 = vsyncpa %s22, 0
    loop: start=0, step=1, limit=4
    $region2: #{tpu_custom_call.1} parent=1 // loop_pre_header
      _
    $region3: #{tpu_custom_call.1} parent=1 // loop_header
      %s25 = sphi 0, %s29
      %p26 = scmp.ge.s32.totalorder %s25, 4
      %s35 = sphi 0, %s37
      %s38 = sphi 0, %s35
      %s39 = sphi 0, %s38
      %s55 = sphi 0, %s39
      %s61 = sphi 0, %s63
      %s64 = sphi 0, %s61
      %s65 = sphi 0, %s64
      %s81 = sphi 0, %s65
      %s87 = sphi 0, %s89
      %s90 = sphi 0, %s87
      %s91 = sphi 0, %s90
      %s107 = sphi 0, %s91
      %s111 = sphi 0, %s111
      %s113 = sphi 0, %s111
      %s114 = sphi 0, %s113
      %s128 = sphi 0, %s114
      %s132 = sphi 0, %s132
      %s134 = sphi 0, %s132
      %s135 = sphi 0, %s134
      %s149 = sphi 0, %s135
      %s153 = sphi 0, %s153
      %s155 = sphi 0, %s153
      %s156 = sphi 0, %s155
      %s170 = sphi 0, %s156
      %s174 = sphi 0, %s174
      %s176 = sphi 0, %s174
      %s177 = sphi 0, %s176
      %s191 = sphi 0, %s177
      %s195 = sphi 0, %s195
      %s197 = sphi 0, %s195
      %s198 = sphi 0, %s197
      %s212 = sphi 0, %s198
      %s216 = sphi 0, %s216
      %s218 = sphi 0, %s216
      %s219 = sphi 0, %s218
      %s233 = sphi 0, %s219
      %s237 = sphi 0, %s237
      %s239 = sphi 0, %s237
      %s240 = sphi 0, %s239
      %s254 = sphi 0, %s240
      %s258 = sphi 0, %s258
      %s260 = sphi 0, %s258
      %s261 = sphi 0, %s260
      %s275 = sphi 0, %s261
      %s281 = sphi 0, %s283
      %s284 = sphi 0, %s281
      %s285 = sphi 0, %s284
      %s301 = sphi 0, %s285
    $region4: #{tpu_custom_call.1} parent=1 // loop_header_branch
      %28 = sbr.rel (%p26) target = $region8
    $region5: #{tpu_custom_call.1} parent=1 // loop_body
      %s30 = ssub.s32 %s25, 1
      %s31 = ssub.s32 %s25, 2
      %s32 = sadd.s32 %s25, 1
      %s33 = ssub.s32 %s25, %s32
      %p34 = scmp.eq.s32.totalorder %s33, 0
      %s36 = sadd.s32 %s35, 1
      %s37 = scalar_select %p34, %s35, %s36
      %p40 = pneg %p34
      %p41 = scmp.eq.s32.totalorder %s25, 1
      %p42 = por %p40, %p41
      %p43 = scmp.ne.s32.totalorder %s35, %s38
      %p44 = scmp.eq.s32.totalorder %s25, 0
      %p45 = por %p43, %p44
      %p46 = scmp.ne.s32.totalorder %s35, %s38
      %p47 = scmp.eq.s32.totalorder %s30, 1
      %p48 = por %p46, %p47
      %p49 = scmp.ne.s32.totalorder %s38, %s39
      %p50 = scmp.eq.s32.totalorder %s30, 0
      %p51 = por %p49, %p50
      %p52 = scmp.ne.s32.totalorder %s38, %s39
      %p53 = scmp.eq.s32.totalorder %s31, 1
      %p54 = por %p52, %p53
      %p56 = scmp.ne.s32.totalorder %s39, %s55
      %p57 = scmp.eq.s32.totalorder %s31, 0
      %p58 = por %p56, %p57
      %s59 = ssub.s32 %s25, %s32
      %p60 = scmp.eq.s32.totalorder %s59, 0
      %s62 = sadd.s32 %s61, 1
      %s63 = scalar_select %p60, %s61, %s62
      %p66 = pneg %p60
      %p67 = scmp.eq.s32.totalorder %s25, 1
      %p68 = por %p66, %p67
      %p69 = scmp.ne.s32.totalorder %s61, %s64
      %p70 = scmp.eq.s32.totalorder %s25, 0
      %p71 = por %p69, %p70
      %p72 = scmp.ne.s32.totalorder %s61, %s64
      %p73 = scmp.eq.s32.totalorder %s30, 1
      %p74 = por %p72, %p73
      %p75 = scmp.ne.s32.totalorder %s64, %s65
      %p76 = scmp.eq.s32.totalorder %s30, 0
      %p77 = por %p75, %p76
      %p78 = scmp.ne.s32.totalorder %s64, %s65
      %p79 = scmp.eq.s32.totalorder %s31, 1
      %p80 = por %p78, %p79
      %p82 = scmp.ne.s32.totalorder %s65, %s81
      %p83 = scmp.eq.s32.totalorder %s31, 0
      %p84 = por %p82, %p83
      %s85 = ssub.s32 %s25, %s32
      %p86 = scmp.eq.s32.totalorder %s85, 0
      %s88 = sadd.s32 %s87, 1
      %s89 = scalar_select %p86, %s87, %s88
      %p92 = pneg %p86
      %p93 = scmp.eq.s32.totalorder %s25, 1
      %p94 = por %p92, %p93
      %p95 = scmp.ne.s32.totalorder %s87, %s90
      %p96 = scmp.eq.s32.totalorder %s25, 0
      %p97 = por %p95, %p96
      %p98 = scmp.ne.s32.totalorder %s87, %s90
      %p99 = scmp.eq.s32.totalorder %s30, 1
      %p100 = por %p98, %p99
      %p101 = scmp.ne.s32.totalorder %s90, %s91
      %p102 = scmp.eq.s32.totalorder %s30, 0
      %p103 = por %p101, %p102
      %p104 = scmp.ne.s32.totalorder %s90, %s91
      %p105 = scmp.eq.s32.totalorder %s31, 1
      %p106 = por %p104, %p105
      %p108 = scmp.ne.s32.totalorder %s91, %s107
      %p109 = scmp.eq.s32.totalorder %s31, 0
      %p110 = por %p108, %p109
      %s112 = sadd.s32 %s111, 1
      %p115 = scmp.eq.s32.totalorder %s25, 1
      %p116 = scmp.ne.s32.totalorder %s111, %s113
      %p117 = scmp.eq.s32.totalorder %s25, 0
      %p118 = por %p116, %p117
      %p119 = scmp.ne.s32.totalorder %s111, %s113
      %p120 = scmp.eq.s32.totalorder %s30, 1
      %p121 = por %p119, %p120
      %p122 = scmp.ne.s32.totalorder %s113, %s114
      %p123 = scmp.eq.s32.totalorder %s30, 0
      %p124 = por %p122, %p123
      %p125 = scmp.ne.s32.totalorder %s113, %s114
      %p126 = scmp.eq.s32.totalorder %s31, 1
      %p127 = por %p125, %p126
      %p129 = scmp.ne.s32.totalorder %s114, %s128
      %p130 = scmp.eq.s32.totalorder %s31, 0
      %p131 = por %p129, %p130
      %s133 = sadd.s32 %s132, 1
      %p136 = scmp.eq.s32.totalorder %s25, 1
      %p137 = scmp.ne.s32.totalorder %s132, %s134
      %p138 = scmp.eq.s32.totalorder %s25, 0
      %p139 = por %p137, %p138
      %p140 = scmp.ne.s32.totalorder %s132, %s134
      %p141 = scmp.eq.s32.totalorder %s30, 1
      %p142 = por %p140, %p141
      %p143 = scmp.ne.s32.totalorder %s134, %s135
      %p144 = scmp.eq.s32.totalorder %s30, 0
      %p145 = por %p143, %p144
      %p146 = scmp.ne.s32.totalorder %s134, %s135
      %p147 = scmp.eq.s32.totalorder %s31, 1
      %p148 = por %p146, %p147
      %p150 = scmp.ne.s32.totalorder %s135, %s149
      %p151 = scmp.eq.s32.totalorder %s31, 0
      %p152 = por %p150, %p151
      %s154 = sadd.s32 %s153, 1
      %p157 = scmp.eq.s32.totalorder %s25, 1
      %p158 = scmp.ne.s32.totalorder %s153, %s155
      %p159 = scmp.eq.s32.totalorder %s25, 0
      %p160 = por %p158, %p159
      %p161 = scmp.ne.s32.totalorder %s153, %s155
      %p162 = scmp.eq.s32.totalorder %s30, 1
      %p163 = por %p161, %p162
      %p164 = scmp.ne.s32.totalorder %s155, %s156
      %p165 = scmp.eq.s32.totalorder %s30, 0
      %p166 = por %p164, %p165
      %p167 = scmp.ne.s32.totalorder %s155, %s156
      %p168 = scmp.eq.s32.totalorder %s31, 1
      %p169 = por %p167, %p168
      %p171 = scmp.ne.s32.totalorder %s156, %s170
      %p172 = scmp.eq.s32.totalorder %s31, 0
      %p173 = por %p171, %p172
      %s175 = sadd.s32 %s174, 1
      %p178 = scmp.eq.s32.totalorder %s25, 1
      %p179 = scmp.ne.s32.totalorder %s174, %s176
      %p180 = scmp.eq.s32.totalorder %s25, 0
      %p181 = por %p179, %p180
      %p182 = scmp.ne.s32.totalorder %s174, %s176
      %p183 = scmp.eq.s32.totalorder %s30, 1
      %p184 = por %p182, %p183
      %p185 = scmp.ne.s32.totalorder %s176, %s177
      %p186 = scmp.eq.s32.totalorder %s30, 0
      %p187 = por %p185, %p186
      %p188 = scmp.ne.s32.totalorder %s176, %s177
      %p189 = scmp.eq.s32.totalorder %s31, 1
      %p190 = por %p188, %p189
      %p192 = scmp.ne.s32.totalorder %s177, %s191
      %p193 = scmp.eq.s32.totalorder %s31, 0
      %p194 = por %p192, %p193
      %s196 = sadd.s32 %s195, 1
      %p199 = scmp.eq.s32.totalorder %s25, 1
      %p200 = scmp.ne.s32.totalorder %s195, %s197
      %p201 = scmp.eq.s32.totalorder %s25, 0
      %p202 = por %p200, %p201
      %p203 = scmp.ne.s32.totalorder %s195, %s197
      %p204 = scmp.eq.s32.totalorder %s30, 1
      %p205 = por %p203, %p204
      %p206 = scmp.ne.s32.totalorder %s197, %s198
      %p207 = scmp.eq.s32.totalorder %s30, 0
      %p208 = por %p206, %p207
      %p209 = scmp.ne.s32.totalorder %s197, %s198
      %p210 = scmp.eq.s32.totalorder %s31, 1
      %p211 = por %p209, %p210
      %p213 = scmp.ne.s32.totalorder %s198, %s212
      %p214 = scmp.eq.s32.totalorder %s31, 0
      %p215 = por %p213, %p214
      %s217 = sadd.s32 %s216, 1
      %p220 = scmp.eq.s32.totalorder %s25, 1
      %p221 = scmp.ne.s32.totalorder %s216, %s218
      %p222 = scmp.eq.s32.totalorder %s25, 0
      %p223 = por %p221, %p222
      %p224 = scmp.ne.s32.totalorder %s216, %s218
      %p225 = scmp.eq.s32.totalorder %s30, 1
      %p226 = por %p224, %p225
      %p227 = scmp.ne.s32.totalorder %s218, %s219
      %p228 = scmp.eq.s32.totalorder %s30, 0
      %p229 = por %p227, %p228
      %p230 = scmp.ne.s32.totalorder %s218, %s219
      %p231 = scmp.eq.s32.totalorder %s31, 1
      %p232 = por %p230, %p231
      %p234 = scmp.ne.s32.totalorder %s219, %s233
      %p235 = scmp.eq.s32.totalorder %s31, 0
      %p236 = por %p234, %p235
      %s238 = sadd.s32 %s237, 1
      %p241 = scmp.eq.s32.totalorder %s25, 1
      %p242 = scmp.ne.s32.totalorder %s237, %s239
      %p243 = scmp.eq.s32.totalorder %s25, 0
      %p244 = por %p242, %p243
      %p245 = scmp.ne.s32.totalorder %s237, %s239
      %p246 = scmp.eq.s32.totalorder %s30, 1
      %p247 = por %p245, %p246
      %p248 = scmp.ne.s32.totalorder %s239, %s240
      %p249 = scmp.eq.s32.totalorder %s30, 0
      %p250 = por %p248, %p249
      %p251 = scmp.ne.s32.totalorder %s239, %s240
      %p252 = scmp.eq.s32.totalorder %s31, 1
      %p253 = por %p251, %p252
      %p255 = scmp.ne.s32.totalorder %s240, %s254
      %p256 = scmp.eq.s32.totalorder %s31, 0
      %p257 = por %p255, %p256
      %s259 = sadd.s32 %s258, 1
      %p262 = scmp.eq.s32.totalorder %s25, 1
      %p263 = scmp.ne.s32.totalorder %s258, %s260
      %p264 = scmp.eq.s32.totalorder %s25, 0
      %p265 = por %p263, %p264
      %p266 = scmp.ne.s32.totalorder %s258, %s260
      %p267 = scmp.eq.s32.totalorder %s30, 1
      %p268 = por %p266, %p267
      %p269 = scmp.ne.s32.totalorder %s260, %s261
      %p270 = scmp.eq.s32.totalorder %s30, 0
      %p271 = por %p269, %p270
      %p272 = scmp.ne.s32.totalorder %s260, %s261
      %p273 = scmp.eq.s32.totalorder %s31, 1
      %p274 = por %p272, %p273
      %p276 = scmp.ne.s32.totalorder %s261, %s275
      %p277 = scmp.eq.s32.totalorder %s31, 0
      %p278 = por %p276, %p277
      %s279 = ssub.s32 %s25, %s32
      %p280 = scmp.eq.s32.totalorder %s279, 0
      %s282 = sadd.s32 %s281, 1
      %s283 = scalar_select %p280, %s281, %s282
      %p286 = pneg %p280
      %p287 = scmp.eq.s32.totalorder %s25, 1
      %p288 = por %p286, %p287
      %p289 = scmp.ne.s32.totalorder %s281, %s284
      %p290 = scmp.eq.s32.totalorder %s25, 0
      %p291 = por %p289, %p290
      %p292 = scmp.ne.s32.totalorder %s281, %s284
      %p293 = scmp.eq.s32.totalorder %s30, 1
      %p294 = por %p292, %p293
      %p295 = scmp.ne.s32.totalorder %s284, %s285
      %p296 = scmp.eq.s32.totalorder %s30, 0
      %p297 = por %p295, %p296
      %p298 = scmp.ne.s32.totalorder %s284, %s285
      %p299 = scmp.eq.s32.totalorder %s31, 1
      %p300 = por %p298, %p299
      %p302 = scmp.ne.s32.totalorder %s285, %s301
      %p303 = scmp.eq.s32.totalorder %s31, 0
      %p304 = por %p302, %p303
      %p305 = scmp.le.s32.totalorder 1, %s25
      %p306 = scmp.lt.s32.totalorder %s25, 3
      %p307 = pnand %p305, %p306
      %p308 = pneg %p307
      // Predicated region
      $region9: #{tpu_custom_call.1} parent=5 // pred_check
        _
      $region10: #{tpu_custom_call.1} parent=5 // pred_check_branch
        %310 = sbr.rel (%p307) target = $region12
      $region11: #{tpu_custom_call.1} parent=5 // pred_region
        %s311 = ssub.s32 %s25, 1
        // Predicated region
        $region13: #{tpu_custom_call.1} parent=11 // pred_check
          %p312 = pneg %p124
        $region14: #{tpu_custom_call.1} parent=11 // pred_check_branch
          %314 = sbr.rel (%p312) target = $region16
        $region15: #{tpu_custom_call.1} parent=11 // pred_region
          _
        $region16: #{tpu_custom_call.1} parent=11 // pred_fallthru
          _
        // Predicated region
        $region17: #{tpu_custom_call.1} parent=11 // pred_check
          %p315 = pneg %p145
        $region18: #{tpu_custom_call.1} parent=11 // pred_check_branch
          %317 = sbr.rel (%p315) target = $region20
        $region19: #{tpu_custom_call.1} parent=11 // pred_region
          _
        $region20: #{tpu_custom_call.1} parent=11 // pred_fallthru
          _
        // Predicated region
        $region21: #{tpu_custom_call.1} parent=11 // pred_check
          %p318 = pneg %p166
        $region22: #{tpu_custom_call.1} parent=11 // pred_check_branch
          %320 = sbr.rel (%p318) target = $region24
        $region23: #{tpu_custom_call.1} parent=11 // pred_region
          _
        $region24: #{tpu_custom_call.1} parent=11 // pred_fallthru
          _
        // Predicated region
        $region25: #{tpu_custom_call.1} parent=11 // pred_check
          %p321 = pneg %p187
        $region26: #{tpu_custom_call.1} parent=11 // pred_check_branch
          %323 = sbr.rel (%p321) target = $region28
        $region27: #{tpu_custom_call.1} parent=11 // pred_region
          _
        $region28: #{tpu_custom_call.1} parent=11 // pred_fallthru
          _
        // Predicated region
        $region29: #{tpu_custom_call.1} parent=11 // pred_check
          %p324 = pneg %p208
        $region30: #{tpu_custom_call.1} parent=11 // pred_check_branch
          %326 = sbr.rel (%p324) target = $region32
        $region31: #{tpu_custom_call.1} parent=11 // pred_region
          %328 = vsyncadd [#allocation7], 0
          %s329 = sshll.u32 %s7, 4
          %s330 = int_to_ptr.hbm [resolvable:$true] %s329
          %s331 = sshll.u32 [#allocation6], 4
          %s332 = int_to_ptr.vmem [resolvable:$true] %s331
          %337 = dma.hbm_to_vmem [thread:$0]  %s330, 512, %s332, [#allocation7], 128, 128, 8
        $region32: #{tpu_custom_call.1} parent=11 // pred_fallthru
          _
        // Predicated region
        $region33: #{tpu_custom_call.1} parent=11 // pred_check
          %p338 = pneg %p229
        $region34: #{tpu_custom_call.1} parent=11 // pred_check_branch
          %340 = sbr.rel (%p338) target = $region36
        $region35: #{tpu_custom_call.1} parent=11 // pred_region
          %342 = vsyncadd [#allocation7], 0
          %s343 = sshll.u32 %s8, 4
          %s344 = int_to_ptr.hbm [resolvable:$true] %s343
          %s345 = sshll.u32 [#allocation8], 4
          %s346 = int_to_ptr.vmem [resolvable:$true] %s345
          %351 = dma.hbm_to_vmem [thread:$0]  %s344, 512, %s346, [#allocation7], 128, 128, 8
        $region36: #{tpu_custom_call.1} parent=11 // pred_fallthru
          _
        // Predicated region
        $region37: #{tpu_custom_call.1} parent=11 // pred_check
          %p352 = pneg %p250
        $region38: #{tpu_custom_call.1} parent=11 // pred_check_branch
          %354 = sbr.rel (%p352) target = $region40
        $region39: #{tpu_custom_call.1} parent=11 // pred_region
          %356 = vsyncadd [#allocation10], 0
          %s357 = sshll.u32 %s9, 4
          %s358 = int_to_ptr.hbm [resolvable:$true] %s357
          %s359 = sshll.u32 [#allocation9], 4
          %s360 = int_to_ptr.vmem [resolvable:$true] %s359
          %365 = dma.hbm_to_vmem [thread:$0]  %s358, 512, %s360, [#allocation10], 128, 128, 8
        $region40: #{tpu_custom_call.1} parent=11 // pred_fallthru
          _
        // Predicated region
        $region41: #{tpu_custom_call.1} parent=11 // pred_check
          %p366 = pneg %p271
        $region42: #{tpu_custom_call.1} parent=11 // pred_check_branch
          %368 = sbr.rel (%p366) target = $region44
        $region43: #{tpu_custom_call.1} parent=11 // pred_region
          %370 = vsyncadd [#allocation10], 0
          %s371 = sshll.u32 %s10, 4
          %s372 = int_to_ptr.hbm [resolvable:$true] %s371
          %s373 = sshll.u32 [#allocation11], 4
          %s374 = int_to_ptr.vmem [resolvable:$true] %s373
          %379 = dma.hbm_to_vmem [thread:$0]  %s372, 512, %s374, [#allocation10], 128, 128, 8
        $region44: #{tpu_custom_call.1} parent=11 // pred_fallthru
          _
      $region12: #{tpu_custom_call.1} parent=5 // pred_fallthru
        _
      %p380 = scmp.lt.s32.totalorder %s25, 2
      // Predicated region
      $region45: #{tpu_custom_call.1} parent=5 // pred_check
        %p381 = pneg %p380
      $region46: #{tpu_custom_call.1} parent=5 // pred_check_branch
        %383 = sbr.rel (%p381) target = $region48
      $region47: #{tpu_custom_call.1} parent=5 // pred_region
        // Predicated region
        $region49: #{tpu_custom_call.1} parent=47 // pred_check
          %p384 = pneg %p45
        $region50: #{tpu_custom_call.1} parent=47 // pred_check_branch
          %386 = sbr.rel (%p384) target = $region52
        $region51: #{tpu_custom_call.1} parent=47 // pred_region
          %p387 = scmp.lt.s32.totalorder %s25, 1
          %s388 = scalar_select %p387, %s25, 1
          %s389 = smul.addr %s388, 8
          %s390 = scalar_lea.vmem %s0, %s389
        $region52: #{tpu_custom_call.1} parent=47 // pred_fallthru
          _
        // Predicated region
        $region53: #{tpu_custom_call.1} parent=47 // pred_check
          %p391 = pneg %p71
        $region54: #{tpu_custom_call.1} parent=47 // pred_check_branch
          %393 = sbr.rel (%p391) target = $region56
        $region55: #{tpu_custom_call.1} parent=47 // pred_region
          %p394 = scmp.lt.s32.totalorder %s25, 1
          %s395 = scalar_select %p394, %s25, 1
          %s396 = smul.addr %s395, 8
          %s397 = scalar_lea.vmem %s1, %s396
        $region56: #{tpu_custom_call.1} parent=47 // pred_fallthru
          _
        // Predicated region
        $region57: #{tpu_custom_call.1} parent=47 // pred_check
          %p398 = pneg %p97
        $region58: #{tpu_custom_call.1} parent=47 // pred_check_branch
          %400 = sbr.rel (%p398) target = $region60
        $region59: #{tpu_custom_call.1} parent=47 // pred_region
          %s401 = sand.u32 %s87, 1
          %s402 = scalar_lea.sflag [#allocation4], %s401
          %s403 = sand.u32 %s87, 1
          %s404 = smul.addr %s403, 8
          %s405 = scalar_lea.vmem [#allocation3], %s404
          %407 = vsyncadd %s402, 0
          %s408 = smul.addr %s25, 8
          %s409 = scalar_lea.hbm %s2, %s408
          %s411 = sshll.u32 %s409, 4
          %s412 = int_to_ptr.hbm [resolvable:$true] %s411
          %s413 = sshll.u32 %s405, 4
          %s414 = int_to_ptr.vmem [resolvable:$true] %s413
          %416 = dma.hbm_to_vmem [thread:$0]  %s412, 128, %s414, %s402
        $region60: #{tpu_custom_call.1} parent=47 // pred_fallthru
          _
      $region48: #{tpu_custom_call.1} parent=5 // pred_fallthru
        _
      %p417 = scmp.le.s32.totalorder 1, %s25
      %p418 = scmp.lt.s32.totalorder %s25, 3
      %p419 = pnand %p417, %p418
      %p420 = pneg %p419
      // Predicated region
      $region61: #{tpu_custom_call.1} parent=5 // pred_check
        _
      $region62: #{tpu_custom_call.1} parent=5 // pred_check_branch
        %422 = sbr.rel (%p419) target = $region64
      $region63: #{tpu_custom_call.1} parent=5 // pred_region
        %s423 = ssub.s32 %s25, 1
        %s424 = sand.u32 %s90, 1
        %s425 = scalar_lea.sflag [#allocation4], %s424
        %s426 = sand.u32 %s90, 1
        %s427 = smul.addr %s426, 8
        %s428 = scalar_lea.vmem [#allocation3], %s427
        // Predicated region
        $region65: #{tpu_custom_call.1} parent=63 // pred_check
          %p429 = pneg %p103
        $region66: #{tpu_custom_call.1} parent=63 // pred_check_branch
          %431 = sbr.rel (%p429) target = $region68
        $region67: #{tpu_custom_call.1} parent=63 // pred_region
          %433 = dma.done %s425, 128
        $region68: #{tpu_custom_call.1} parent=63 // pred_fallthru
          _
        // Predicated region
        $region69: #{tpu_custom_call.1} parent=63 // pred_check
          %p434 = pneg %p208
        $region70: #{tpu_custom_call.1} parent=63 // pred_check_branch
          %436 = sbr.rel (%p434) target = $region72
        $region71: #{tpu_custom_call.1} parent=63 // pred_region
          %438 = dma.done [#allocation7], 512
        $region72: #{tpu_custom_call.1} parent=63 // pred_fallthru
          _
        // Predicated region
        $region73: #{tpu_custom_call.1} parent=63 // pred_check
          %p439 = pneg %p229
        $region74: #{tpu_custom_call.1} parent=63 // pred_check_branch
          %441 = sbr.rel (%p439) target = $region76
        $region75: #{tpu_custom_call.1} parent=63 // pred_region
          %443 = dma.done [#allocation7], 512
        $region76: #{tpu_custom_call.1} parent=63 // pred_fallthru
          _
        // Predicated region
        $region77: #{tpu_custom_call.1} parent=63 // pred_check
          %p444 = pneg %p250
        $region78: #{tpu_custom_call.1} parent=63 // pred_check_branch
          %446 = sbr.rel (%p444) target = $region80
        $region79: #{tpu_custom_call.1} parent=63 // pred_region
          %448 = dma.done [#allocation10], 512
        $region80: #{tpu_custom_call.1} parent=63 // pred_fallthru
          _
        // Predicated region
        $region81: #{tpu_custom_call.1} parent=63 // pred_check
          %p449 = pneg %p271
        $region82: #{tpu_custom_call.1} parent=63 // pred_check_branch
          %451 = sbr.rel (%p449) target = $region84
        $region83: #{tpu_custom_call.1} parent=63 // pred_region
          %453 = dma.done [#allocation10], 512
        $region84: #{tpu_custom_call.1} parent=63 // pred_fallthru
          _
        %p454 = scmp.lt.s32.totalorder %s30, 1
        %s455 = scalar_select %p454, %s30, 1
        %s456 = smul.addr %s455, 8
        %s457 = scalar_lea.vmem %s0, %s456
        %p458 = pneg %p51
        %p459 = pneg %p48
        %p460 = scmp.lt.s32.totalorder %s30, 1
        %s461 = scalar_select %p460, %s30, 1
        %s462 = smul.addr %s461, 8
        %s463 = scalar_lea.vmem %s1, %s462
        %p464 = pneg %p77
        %p465 = pneg %p74
        %s466 = sand.u32 %s90, 1
        %s467 = scalar_lea.sflag [#allocation4], %s466
        %s468 = sand.u32 %s90, 1
        %s469 = smul.addr %s468, 8
        %s470 = scalar_lea.vmem [#allocation3], %s469
        %p471 = pneg %p103
        %p472 = pneg %p100
        %p473 = pneg %p124
        %p474 = pneg %p121
        %p475 = pneg %p145
        %p476 = pneg %p142
        %p477 = pneg %p166
        %p478 = pneg %p163
        %p479 = pneg %p187
        %p480 = pneg %p184
        %p481 = pneg %p208
        %p482 = pneg %p205
        %p483 = pneg %p229
        %p484 = pneg %p226
        %p485 = pneg %p250
        %p486 = pneg %p247
        %p487 = pneg %p271
        %p488 = pneg %p268
        %p489 = pneg %p297
        %p490 = pneg %p294
        %s491 = sand.u32 %s284, 1
        %s492 = scalar_lea.sflag [#allocation5], %s491
        %s493 = sand.u32 %s284, 1
        %s494 = smul.addr %s493, 8
        %s495 = scalar_lea.vmem [#allocation12], %s494
        %p496 = scmp.lt.s32.totalorder %s30, 1
        %s497 = scalar_select %p496, %s30, 1
        %s498 = smul.addr %s497, 8
        %s499 = scalar_lea.vmem %s0, %s498
        %p500 = scmp.lt.s32.totalorder %s30, 1
        %s501 = scalar_select %p500, %s30, 1
        %s502 = smul.addr %s501, 8
        %s503 = scalar_lea.vmem %s1, %s502
        %v504 = vld [vmem:[%s3] sm:$0x7]
        %v505 = vld [vmem:[%s5] sm:$0xff]
        %v506 = vld [vmem:[%s5 + $0x8] sm:$0xff]
        %v507 = vld [vmem:[%s5 + $0x10] sm:$0xff]
        %v508 = vld [vmem:[%s5 + $0x18] sm:$0xff]
        %v509 = vld [vmem:[%s4] sm:$0x1]
        %v510 = vld [vmem:[%s6] sm:$0x1]
        %v511 = vld [vmem:[%s499] sm:$0xff]
        %v513 = vperm.slane %v509, 0
        %vm515 = vcmask 23552
        %v517 = vsel %vm515, %v511, 0
        %vm519 = vcmask 1042432
        %v521 = vsel %vm519, %v504, 0
        %523 = vmatpush.msra.mxu0 0.0
        %524 = vmatpush.msra.mxu0 0.0
        %525 = vmatpush.msra.mxu0 0.0
        %526 = vmatpush.msra.mxu0 0.0
        %527 = vmatpush.msra.mxu0 0.0
        %528 = vmatpush.msra.mxu0 0.0
        %529 = vmatpush.msra.mxu0 0.0
        %530 = vmatpush.msra.mxu0 0.0
        %531 = vmatpush.msra.mxu0 0.0
        %532 = vmatpush.msra.mxu0 0.0
        %533 = vmatpush.msra.mxu0 0.0
        %534 = vmatpush.msra.mxu0 0.0
        %535 = vmatpush.msra.mxu0 0.0
        %536 = vmatpush.msra.mxu0 0.0
        %537 = vmatpush.msra.mxu0 0.0
        %538 = vmatpush.msra.mxu0 %v521
        %539 = vmatmul.f32.gmra.mxu0 %v517
        %v540 = vpop.f32.mrf.mxu0
        %v541 = vadd.f32 %v513, %v540
        %542 = vdwg.mxu0
        %v543 = vmax.f32 %v541, 0.0
        %v545 = vperm.slane %v510, 0
        %vm547 = vcmask 261120
        %v549 = vsel %vm547, %v543, 0
        %551 = vmatpush.msra.mxu0 0.0
        %552 = vmatpush.msra.mxu0 0.0
        %553 = vmatpush.msra.mxu0 0.0
        %554 = vmatpush.msra.mxu0 0.0
        %555 = vmatpush.msra.mxu0 0.0
        %556 = vmatpush.msra.mxu0 0.0
        %557 = vmatpush.msra.mxu0 0.0
        %558 = vmatpush.msra.mxu0 0.0
        %559 = vmatpush.msra.mxu0 0.0
        %560 = vmatpush.msra.mxu0 0.0
        %561 = vmatpush.msra.mxu0 0.0
        %562 = vmatpush.msra.mxu0 0.0
        %563 = vmatpush.msra.mxu0 %v508
        %564 = vmatpush.msra.mxu0 %v507
        %565 = vmatpush.msra.mxu0 %v506
        %566 = vmatpush.msra.mxu0 %v505
        %567 = vmatmul.f32.gmra.mxu0 %v549
        %v568 = vpop.f32.mrf.mxu0
        %v569 = vadd.f32 %v545, %v568
        %570 = vdwg.mxu0
        %v571 = vld [vmem:[%s503] sm:$0xff]
        %v573 = vsel %vm515, %v571, 0
        %575 = vmatpush.msra.mxu0 0.0
        %576 = vmatpush.msra.mxu0 0.0
        %577 = vmatpush.msra.mxu0 0.0
        %578 = vmatpush.msra.mxu0 0.0
        %579 = vmatpush.msra.mxu0 0.0
        %580 = vmatpush.msra.mxu0 0.0
        %581 = vmatpush.msra.mxu0 0.0
        %582 = vmatpush.msra.mxu0 0.0
        %583 = vmatpush.msra.mxu0 0.0
        %584 = vmatpush.msra.mxu0 0.0
        %585 = vmatpush.msra.mxu0 0.0
        %586 = vmatpush.msra.mxu0 0.0
        %587 = vmatpush.msra.mxu0 0.0
        %588 = vmatpush.msra.mxu0 0.0
        %589 = vmatpush.msra.mxu0 0.0
        %590 = vmatpush.msra.mxu0 %v521
        %591 = vmatmul.f32.gmra.mxu0 %v573
        %v592 = vpop.f32.mrf.mxu0
        %v593 = vadd.f32 %v513, %v592
        %594 = vdwg.mxu0
        %v595 = vmax.f32 %v593, 0.0
        %v597 = vsel %vm547, %v595, 0
        %599 = vmatpush.msra.mxu0 0.0
        %600 = vmatpush.msra.mxu0 0.0
        %601 = vmatpush.msra.mxu0 0.0
        %602 = vmatpush.msra.mxu0 0.0
        %603 = vmatpush.msra.mxu0 0.0
        %604 = vmatpush.msra.mxu0 0.0
        %605 = vmatpush.msra.mxu0 0.0
        %606 = vmatpush.msra.mxu0 0.0
        %607 = vmatpush.msra.mxu0 0.0
        %608 = vmatpush.msra.mxu0 0.0
        %609 = vmatpush.msra.mxu0 0.0
        %610 = vmatpush.msra.mxu0 0.0
        %611 = vmatpush.msra.mxu0 %v508
        %612 = vmatpush.msra.mxu0 %v507
        %613 = vmatpush.msra.mxu0 %v506
        %614 = vmatpush.msra.mxu0 %v505
        %615 = vmatmul.f32.gmra.mxu0 %v597
        %v616 = vpop.f32.mrf.mxu0
        %v617 = vadd.f32 %v545, %v616
        %618 = vdwg.mxu0
        %v619 = vld [vmem:[%s428] sm:$0xff]
        %v620 = vld [vmem:[#allocation6] sm:$0xff]
        %v621 = vld [vmem:[#allocation6 + $0x8] sm:$0xff]
        %v622 = vld [vmem:[#allocation6 + $0x10] sm:$0xff]
        %v623 = vld [vmem:[#allocation6 + $0x18] sm:$0xff]
        %v625 = vsel %vm547, %v569, 0
        %627 = vmatpush.msra.mxu0 0.0
        %628 = vmatpush.msra.mxu0 0.0
        %629 = vmatpush.msra.mxu0 0.0
        %630 = vmatpush.msra.mxu0 0.0
        %631 = vmatpush.msra.mxu0 0.0
        %632 = vmatpush.msra.mxu0 0.0
        %633 = vmatpush.msra.mxu0 0.0
        %634 = vmatpush.msra.mxu0 0.0
        %635 = vmatpush.msra.mxu0 0.0
        %636 = vmatpush.msra.mxu0 0.0
        %637 = vmatpush.msra.mxu0 0.0
        %638 = vmatpush.msra.mxu0 0.0
        %639 = vmatpush.msra.mxu0 %v623
        %640 = vmatpush.msra.mxu0 %v622
        %641 = vmatpush.msra.mxu0 %v621
        %642 = vmatpush.msra.mxu0 %v620
        %643 = vmatmul.f32.gmra.mxu0 %v625
        %v644 = vpop.f32.mrf.mxu0
        %v645 = vadd.f32 0.0, %v644
        %646 = vdwg.mxu0
        %v647 = vld [vmem:[#allocation8] sm:$0xff]
        %v648 = vld [vmem:[#allocation8 + $0x8] sm:$0xff]
        %v649 = vld [vmem:[#allocation8 + $0x10] sm:$0xff]
        %v650 = vld [vmem:[#allocation8 + $0x18] sm:$0xff]
        %v652 = vsel %vm547, %v619, 0
        %654 = vmatpush.msra.mxu0 0.0
        %655 = vmatpush.msra.mxu0 0.0
        %656 = vmatpush.msra.mxu0 0.0
        %657 = vmatpush.msra.mxu0 0.0
        %658 = vmatpush.msra.mxu0 0.0
        %659 = vmatpush.msra.mxu0 0.0
        %660 = vmatpush.msra.mxu0 0.0
        %661 = vmatpush.msra.mxu0 0.0
        %662 = vmatpush.msra.mxu0 0.0
        %663 = vmatpush.msra.mxu0 0.0
        %664 = vmatpush.msra.mxu0 0.0
        %665 = vmatpush.msra.mxu0 0.0
        %666 = vmatpush.msra.mxu0 %v650
        %667 = vmatpush.msra.mxu0 %v649
        %668 = vmatpush.msra.mxu0 %v648
        %669 = vmatpush.msra.mxu0 %v647
        %670 = vmatmul.f32.gmra.mxu0 %v652
        %v671 = vpop.f32.mrf.mxu0
        %v672 = vadd.f32 0.0, %v671
        %673 = vdwg.mxu0
        %v674 = vld [vmem:[#allocation9] sm:$0xff]
        %v675 = vld [vmem:[#allocation9 + $0x8] sm:$0xff]
        %v676 = vld [vmem:[#allocation9 + $0x10] sm:$0xff]
        %v677 = vld [vmem:[#allocation9 + $0x18] sm:$0xff]
        %v679 = vsel %vm547, %v617, 0
        %681 = vmatpush.msra.mxu0 0.0
        %682 = vmatpush.msra.mxu0 0.0
        %683 = vmatpush.msra.mxu0 0.0
        %684 = vmatpush.msra.mxu0 0.0
        %685 = vmatpush.msra.mxu0 0.0
        %686 = vmatpush.msra.mxu0 0.0
        %687 = vmatpush.msra.mxu0 0.0
        %688 = vmatpush.msra.mxu0 0.0
        %689 = vmatpush.msra.mxu0 0.0
        %690 = vmatpush.msra.mxu0 0.0
        %691 = vmatpush.msra.mxu0 0.0
        %692 = vmatpush.msra.mxu0 0.0
        %693 = vmatpush.msra.mxu0 %v677
        %694 = vmatpush.msra.mxu0 %v676
        %695 = vmatpush.msra.mxu0 %v675
        %696 = vmatpush.msra.mxu0 %v674
        %697 = vmatmul.f32.gmra.mxu0 %v679
        %v698 = vpop.f32.mrf.mxu0
        %v699 = vadd.f32 0.0, %v698
        %700 = vdwg.mxu0
        %v701 = vmul.f32 %v699, 0.125
        %vm702 = vcmask 64512
        %v704 = vsel %vm702, %v701, 0
        %v707 = vsel %vm702, %v645, 0
        %709 = vmatpush.xpose.msra.mxu0 0.0
        %710 = vmatpush.xpose.msra.mxu0 0.0
        %711 = vmatpush.xpose.msra.mxu0 0.0
        %712 = vmatpush.xpose.msra.mxu0 0.0
        %713 = vmatpush.xpose.msra.mxu0 0.0
        %714 = vmatpush.xpose.msra.mxu0 0.0
        %715 = vmatpush.xpose.msra.mxu0 0.0
        %716 = vmatpush.xpose.msra.mxu0 0.0
        %717 = vmatpush.xpose.msra.mxu0 0.0
        %718 = vmatpush.xpose.msra.mxu0 0.0
        %719 = vmatpush.xpose.msra.mxu0 0.0
        %720 = vmatpush.xpose.msra.mxu0 0.0
        %721 = vmatpush.xpose.msra.mxu0 0.0
        %722 = vmatpush.xpose.msra.mxu0 0.0
        %723 = vmatpush.xpose.msra.mxu0 0.0
        %724 = vmatpush.xpose.msra.mxu0 %v707
        %725 = vmatmul.f32.gmra.mxu0 %v704
        %v726 = vpop.f32.mrf.mxu0
        %v727 = vadd.f32 0.0, %v726
        %728 = vdwg.mxu0
        %v729 = vsel %vm702, %v727, -inf
        %730 = vmax.xlane.f32.xlu0 %v729
        %v731 = vpop.xlane.xlu0 %730
        %v732 = vsub.f32 %v727, %v731
        %v733 = vmul.f32 %v732, 1.442695
        %v734 = vpow.pop %v733
        %v735 = vsel %vm702, %v734, 0.0
        %736 = vadd.xlane.f32.xlu0 %v735
        %v737 = vpop.xlane.xlu0 %736
        %v738 = vrcp.pop %v737
        %v739 = vmul.f32 %v737, %v738
        %v740 = vsub.f32 1.0, %v739
        %v741 = vmul.f32 %v738, %v740
        %v742 = vadd.f32 %v738, %v741
        %vm743 = vweird.f32 %v737
        %vm744 = vweird.f32 %v738
        %vm745 = vmor %vm743, %vm744
        %v746 = vsel %vm745, %v738, %v742
        %v747 = vand.u32 2147483647, %v737
        %vm748 = vcmp.eq.f32.partialorder %v747, 8.507059e+37
        %v749 = vand.u32 %v737, 2147483648
        %v750 = vor.u32 1.1754944e-38, %v749
        %v751 = vsel %vm748, %v750, %v746
        %v752 = vmul.f32 %v734, %v751
        %v754 = vsel %vm702, %v752, 0
        %756 = vmatpush.msra.mxu0 0.0
        %757 = vmatpush.msra.mxu0 0.0
        %758 = vmatpush.msra.mxu0 0.0
        %759 = vmatpush.msra.mxu0 0.0
        %760 = vmatpush.msra.mxu0 0.0
        %761 = vmatpush.msra.mxu0 0.0
        %762 = vmatpush.msra.mxu0 0.0
        %763 = vmatpush.msra.mxu0 0.0
        %764 = vmatpush.msra.mxu0 0.0
        %765 = vmatpush.msra.mxu0 0.0
        %766 = vmatpush.msra.mxu0 0.0
        %767 = vmatpush.msra.mxu0 0.0
        %768 = vmatpush.msra.mxu0 0.0
        %769 = vmatpush.msra.mxu0 0.0
        %770 = vmatpush.msra.mxu0 0.0
        %771 = vmatpush.msra.mxu0 %v672
        %772 = vmatmul.f32.gmra.mxu0 %v754
        %v773 = vpop.f32.mrf.mxu0
        %v774 = vadd.f32 0.0, %v773
        %775 = vdwg.mxu0
        %776 = vst.msk [vmem:[#allocation2] sm:$0xff] %vm702, %v774
        %777 = vrot.lane.b32.xlu0 %v701, 120
        %v778 = vpop.permute.xlu0 %777
        %779 = vrot.lane.b32.xlu0 %v645, 120
        %v780 = vpop.permute.xlu0 %779
        %v781 = vsel %vm702, %v778, 0
        %v783 = vsel %vm702, %v780, 0
        %785 = vmatpush.xpose.msra.mxu0 0.0
        %786 = vmatpush.xpose.msra.mxu0 0.0
        %787 = vmatpush.xpose.msra.mxu0 0.0
        %788 = vmatpush.xpose.msra.mxu0 0.0
        %789 = vmatpush.xpose.msra.mxu0 0.0
        %790 = vmatpush.xpose.msra.mxu0 0.0
        %791 = vmatpush.xpose.msra.mxu0 0.0
        %792 = vmatpush.xpose.msra.mxu0 0.0
        %793 = vmatpush.xpose.msra.mxu0 0.0
        %794 = vmatpush.xpose.msra.mxu0 0.0
        %795 = vmatpush.xpose.msra.mxu0 0.0
        %796 = vmatpush.xpose.msra.mxu0 0.0
        %797 = vmatpush.xpose.msra.mxu0 0.0
        %798 = vmatpush.xpose.msra.mxu0 0.0
        %799 = vmatpush.xpose.msra.mxu0 0.0
        %800 = vmatpush.xpose.msra.mxu0 %v783
        %801 = vmatmul.f32.gmra.mxu0 %v781
        %v802 = vpop.f32.mrf.mxu0
        %v803 = vadd.f32 0.0, %v802
        %804 = vdwg.mxu0
        %v805 = vsel %vm702, %v803, -inf
        %806 = vmax.xlane.f32.xlu0 %v805
        %v807 = vpop.xlane.xlu0 %806
        %v808 = vsub.f32 %v803, %v807
        %v809 = vmul.f32 %v808, 1.442695
        %v810 = vpow.pop %v809
        %v811 = vsel %vm702, %v810, 0.0
        %812 = vadd.xlane.f32.xlu0 %v811
        %v813 = vpop.xlane.xlu0 %812
        %v814 = vrcp.pop %v813
        %v815 = vmul.f32 %v813, %v814
        %v816 = vsub.f32 1.0, %v815
        %v817 = vmul.f32 %v814, %v816
        %v818 = vadd.f32 %v814, %v817
        %vm819 = vweird.f32 %v813
        %vm820 = vweird.f32 %v814
        %vm821 = vmor %vm819, %vm820
        %v822 = vsel %vm821, %v814, %v818
        %v823 = vand.u32 2147483647, %v813
        %vm824 = vcmp.eq.f32.partialorder %v823, 8.507059e+37
        %v825 = vand.u32 %v813, 2147483648
        %v826 = vor.u32 1.1754944e-38, %v825
        %v827 = vsel %vm824, %v826, %v822
        %v828 = vmul.f32 %v810, %v827
        %830 = vrot.lane.b32.xlu0 %v672, 120
        %v831 = vpop.permute.xlu0 %830
        %v834 = vsel %vm702, %v828, 0
        %836 = vmatpush.msra.mxu0 0.0
        %837 = vmatpush.msra.mxu0 0.0
        %838 = vmatpush.msra.mxu0 0.0
        %839 = vmatpush.msra.mxu0 0.0
        %840 = vmatpush.msra.mxu0 0.0
        %841 = vmatpush.msra.mxu0 0.0
        %842 = vmatpush.msra.mxu0 0.0
        %843 = vmatpush.msra.mxu0 0.0
        %844 = vmatpush.msra.mxu0 0.0
        %845 = vmatpush.msra.mxu0 0.0
        %846 = vmatpush.msra.mxu0 0.0
        %847 = vmatpush.msra.mxu0 0.0
        %848 = vmatpush.msra.mxu0 0.0
        %849 = vmatpush.msra.mxu0 0.0
        %850 = vmatpush.msra.mxu0 0.0
        %851 = vmatpush.msra.mxu0 %v831
        %852 = vmatmul.f32.gmra.mxu0 %v834
        %v853 = vpop.f32.mrf.mxu0
        %v854 = vadd.f32 0.0, %v853
        %855 = vdwg.mxu0
        %857 = vrot.lane.b32.xlu0 %v854, 8
        %v858 = vpop.permute.xlu0 %857
        %vm860 = vcmask 130112
        %861 = vst.msk [vmem:[#allocation2] sm:$0xff] %vm860, %v858
        %862 = vrot.lane.b32.xlu0 %v701, 112
        %v863 = vpop.permute.xlu0 %862
        %864 = vrot.lane.b32.xlu0 %v645, 112
        %v865 = vpop.permute.xlu0 %864
        %v866 = vsel %vm702, %v863, 0
        %v868 = vsel %vm702, %v865, 0
        %870 = vmatpush.xpose.msra.mxu0 0.0
        %871 = vmatpush.xpose.msra.mxu0 0.0
        %872 = vmatpush.xpose.msra.mxu0 0.0
        %873 = vmatpush.xpose.msra.mxu0 0.0
        %874 = vmatpush.xpose.msra.mxu0 0.0
        %875 = vmatpush.xpose.msra.mxu0 0.0
        %876 = vmatpush.xpose.msra.mxu0 0.0
        %877 = vmatpush.xpose.msra.mxu0 0.0
        %878 = vmatpush.xpose.msra.mxu0 0.0
        %879 = vmatpush.xpose.msra.mxu0 0.0
        %880 = vmatpush.xpose.msra.mxu0 0.0
        %881 = vmatpush.xpose.msra.mxu0 0.0
        %882 = vmatpush.xpose.msra.mxu0 0.0
        %883 = vmatpush.xpose.msra.mxu0 0.0
        %884 = vmatpush.xpose.msra.mxu0 0.0
        %885 = vmatpush.xpose.msra.mxu0 %v868
        %886 = vmatmul.f32.gmra.mxu0 %v866
        %v887 = vpop.f32.mrf.mxu0
        %v888 = vadd.f32 0.0, %v887
        %889 = vdwg.mxu0
        %v890 = vsel %vm702, %v888, -inf
        %891 = vmax.xlane.f32.xlu0 %v890
        %v892 = vpop.xlane.xlu0 %891
        %v893 = vsub.f32 %v888, %v892
        %v894 = vmul.f32 %v893, 1.442695
        %v895 = vpow.pop %v894
        %v896 = vsel %vm702, %v895, 0.0
        %897 = vadd.xlane.f32.xlu0 %v896
        %v898 = vpop.xlane.xlu0 %897
        %v899 = vrcp.pop %v898
        %v900 = vmul.f32 %v898, %v899
        %v901 = vsub.f32 1.0, %v900
        %v902 = vmul.f32 %v899, %v901
        %v903 = vadd.f32 %v899, %v902
        %vm904 = vweird.f32 %v898
        %vm905 = vweird.f32 %v899
        %vm906 = vmor %vm904, %vm905
        %v907 = vsel %vm906, %v899, %v903
        %v908 = vand.u32 2147483647, %v898
        %vm909 = vcmp.eq.f32.partialorder %v908, 8.507059e+37
        %v910 = vand.u32 %v898, 2147483648
        %v911 = vor.u32 1.1754944e-38, %v910
        %v912 = vsel %vm909, %v911, %v907
        %v913 = vmul.f32 %v895, %v912
        %914 = vrot.lane.b32.xlu0 %v672, 112
        %v915 = vpop.permute.xlu0 %914
        %v918 = vsel %vm702, %v913, 0
        %920 = vmatpush.msra.mxu0 0.0
        %921 = vmatpush.msra.mxu0 0.0
        %922 = vmatpush.msra.mxu0 0.0
        %923 = vmatpush.msra.mxu0 0.0
        %924 = vmatpush.msra.mxu0 0.0
        %925 = vmatpush.msra.mxu0 0.0
        %926 = vmatpush.msra.mxu0 0.0
        %927 = vmatpush.msra.mxu0 0.0
        %928 = vmatpush.msra.mxu0 0.0
        %929 = vmatpush.msra.mxu0 0.0
        %930 = vmatpush.msra.mxu0 0.0
        %931 = vmatpush.msra.mxu0 0.0
        %932 = vmatpush.msra.mxu0 0.0
        %933 = vmatpush.msra.mxu0 0.0
        %934 = vmatpush.msra.mxu0 0.0
        %935 = vmatpush.msra.mxu0 %v915
        %936 = vmatmul.f32.gmra.mxu0 %v918
        %v937 = vpop.f32.mrf.mxu0
        %v938 = vadd.f32 0.0, %v937
        %939 = vdwg.mxu0
        %941 = vrot.lane.b32.xlu0 %v938, 16
        %v942 = vpop.permute.xlu0 %941
        %vm944 = vcmask 195712
        %945 = vst.msk [vmem:[#allocation2] sm:$0xff] %vm944, %v942
        %946 = vrot.lane.b32.xlu0 %v701, 104
        %v947 = vpop.permute.xlu0 %946
        %948 = vrot.lane.b32.xlu0 %v645, 104
        %v949 = vpop.permute.xlu0 %948
        %v950 = vsel %vm702, %v947, 0
        %v952 = vsel %vm702, %v949, 0
        %954 = vmatpush.xpose.msra.mxu0 0.0
        %955 = vmatpush.xpose.msra.mxu0 0.0
        %956 = vmatpush.xpose.msra.mxu0 0.0
        %957 = vmatpush.xpose.msra.mxu0 0.0
        %958 = vmatpush.xpose.msra.mxu0 0.0
        %959 = vmatpush.xpose.msra.mxu0 0.0
        %960 = vmatpush.xpose.msra.mxu0 0.0
        %961 = vmatpush.xpose.msra.mxu0 0.0
        %962 = vmatpush.xpose.msra.mxu0 0.0
        %963 = vmatpush.xpose.msra.mxu0 0.0
        %964 = vmatpush.xpose.msra.mxu0 0.0
        %965 = vmatpush.xpose.msra.mxu0 0.0
        %966 = vmatpush.xpose.msra.mxu0 0.0
        %967 = vmatpush.xpose.msra.mxu0 0.0
        %968 = vmatpush.xpose.msra.mxu0 0.0
        %969 = vmatpush.xpose.msra.mxu0 %v952
        %970 = vmatmul.f32.gmra.mxu0 %v950
        %v971 = vpop.f32.mrf.mxu0
        %v972 = vadd.f32 0.0, %v971
        %973 = vdwg.mxu0
        %v974 = vsel %vm702, %v972, -inf
        %975 = vmax.xlane.f32.xlu0 %v974
        %v976 = vpop.xlane.xlu0 %975
        %v977 = vsub.f32 %v972, %v976
        %v978 = vmul.f32 %v977, 1.442695
        %v979 = vpow.pop %v978
        %v980 = vsel %vm702, %v979, 0.0
        %981 = vadd.xlane.f32.xlu0 %v980
        %v982 = vpop.xlane.xlu0 %981
        %v983 = vrcp.pop %v982
        %v984 = vmul.f32 %v982, %v983
        %v985 = vsub.f32 1.0, %v984
        %v986 = vmul.f32 %v983, %v985
        %v987 = vadd.f32 %v983, %v986
        %vm988 = vweird.f32 %v982
        %vm989 = vweird.f32 %v983
        %vm990 = vmor %vm988, %vm989
        %v991 = vsel %vm990, %v983, %v987
        %v992 = vand.u32 2147483647, %v982
        %vm993 = vcmp.eq.f32.partialorder %v992, 8.507059e+37
        %v994 = vand.u32 %v982, 2147483648
        %v995 = vor.u32 1.1754944e-38, %v994
        %v996 = vsel %vm993, %v995, %v991
        %v997 = vmul.f32 %v979, %v996
        %998 = vrot.lane.b32.xlu0 %v672, 104
        %v999 = vpop.permute.xlu0 %998
        %v1002 = vsel %vm702, %v997, 0
        %1004 = vmatpush.msra.mxu0 0.0
        %1005 = vmatpush.msra.mxu0 0.0
        %1006 = vmatpush.msra.mxu0 0.0
        %1007 = vmatpush.msra.mxu0 0.0
        %1008 = vmatpush.msra.mxu0 0.0
        %1009 = vmatpush.msra.mxu0 0.0
        %1010 = vmatpush.msra.mxu0 0.0
        %1011 = vmatpush.msra.mxu0 0.0
        %1012 = vmatpush.msra.mxu0 0.0
        %1013 = vmatpush.msra.mxu0 0.0
        %1014 = vmatpush.msra.mxu0 0.0
        %1015 = vmatpush.msra.mxu0 0.0
        %1016 = vmatpush.msra.mxu0 0.0
        %1017 = vmatpush.msra.mxu0 0.0
        %1018 = vmatpush.msra.mxu0 0.0
        %1019 = vmatpush.msra.mxu0 %v999
        %1020 = vmatmul.f32.gmra.mxu0 %v1002
        %v1021 = vpop.f32.mrf.mxu0
        %v1022 = vadd.f32 0.0, %v1021
        %1023 = vdwg.mxu0
        %1025 = vrot.lane.b32.xlu0 %v1022, 24
        %v1026 = vpop.permute.xlu0 %1025
        %vm1028 = vcmask 261312
        %1029 = vst.msk [vmem:[#allocation2] sm:$0xff] %vm1028, %v1026
        %v1030 = vld [vmem:[#allocation2] sm:$0xff]
        %v1031 = vld [vmem:[#allocation11] sm:$0xff]
        %v1032 = vld [vmem:[#allocation11 + $0x8] sm:$0xff]
        %v1033 = vld [vmem:[#allocation11 + $0x10] sm:$0xff]
        %v1034 = vld [vmem:[#allocation11 + $0x18] sm:$0xff]
        %v1036 = vsel %vm547, %v1030, 0
        %1038 = vmatpush.msra.mxu0 0.0
        %1039 = vmatpush.msra.mxu0 0.0
        %1040 = vmatpush.msra.mxu0 0.0
        %1041 = vmatpush.msra.mxu0 0.0
        %1042 = vmatpush.msra.mxu0 0.0
        %1043 = vmatpush.msra.mxu0 0.0
        %1044 = vmatpush.msra.mxu0 0.0
        %1045 = vmatpush.msra.mxu0 0.0
        %1046 = vmatpush.msra.mxu0 0.0
        %1047 = vmatpush.msra.mxu0 0.0
        %1048 = vmatpush.msra.mxu0 0.0
        %1049 = vmatpush.msra.mxu0 0.0
        %1050 = vmatpush.msra.mxu0 %v1034
        %1051 = vmatpush.msra.mxu0 %v1033
        %1052 = vmatpush.msra.mxu0 %v1032
        %1053 = vmatpush.msra.mxu0 %v1031
        %1054 = vmatmul.f32.gmra.mxu0 %v1036
        %v1055 = vpop.f32.mrf.mxu0
        %v1056 = vadd.f32 0.0, %v1055
        %1057 = vdwg.mxu0
        %1058 = vst.msk [vmem:[%s495] sm:$0xff] %vm547, %v1056
        %s1059 = sand.u32 %s284, 1
        %s1060 = scalar_lea.sflag [#allocation5], %s1059
        %s1061 = sand.u32 %s284, 1
        %s1062 = smul.addr %s1061, 8
        %s1063 = scalar_lea.vmem [#allocation12], %s1062
        // Predicated region
        $region85: #{tpu_custom_call.1} parent=63 // pred_check
          %p1064 = pneg %p294
        $region86: #{tpu_custom_call.1} parent=63 // pred_check_branch
          %1066 = sbr.rel (%p1064) target = $region88
        $region87: #{tpu_custom_call.1} parent=63 // pred_region
          %1068 = vsyncadd %s1060, 0
          %s1069 = smul.addr %s30, 8
          %s1070 = scalar_lea.hbm %s11, %s1069
          %s1072 = sshll.u32 %s1063, 4
          %s1073 = int_to_ptr.vmem [resolvable:$true] %s1072
          %s1074 = sshll.u32 %s1070, 4
          %s1075 = int_to_ptr.hbm [resolvable:$true] %s1074
          %1077 = dma.vmem_to_hbm [thread:$0]  %s1073, 128, %s1075, %s1060
        $region88: #{tpu_custom_call.1} parent=63 // pred_fallthru
          _
      $region64: #{tpu_custom_call.1} parent=5 // pred_fallthru
        _
      %p1078 = scmp.le.s32.totalorder 2, %s25
      // Predicated region
      $region89: #{tpu_custom_call.1} parent=5 // pred_check
        %p1079 = pneg %p1078
      $region90: #{tpu_custom_call.1} parent=5 // pred_check_branch
        %1081 = sbr.rel (%p1079) target = $region92
      $region91: #{tpu_custom_call.1} parent=5 // pred_region
        %s1082 = ssub.s32 %s25, 2
        // Predicated region
        $region93: #{tpu_custom_call.1} parent=91 // pred_check
          %p1083 = pneg %p300
        $region94: #{tpu_custom_call.1} parent=91 // pred_check_branch
          %1085 = sbr.rel (%p1083) target = $region96
        $region95: #{tpu_custom_call.1} parent=91 // pred_region
          %s1086 = sand.u32 %s285, 1
          %s1087 = scalar_lea.sflag [#allocation5], %s1086
          %s1088 = sand.u32 %s285, 1
          %s1089 = smul.addr %s1088, 8
          %s1090 = scalar_lea.vmem [#allocation12], %s1089
          %1092 = dma.done %s1087, 128
        $region96: #{tpu_custom_call.1} parent=91 // pred_fallthru
          _
      $region92: #{tpu_custom_call.1} parent=5 // pred_fallthru
        _
    $region6: #{tpu_custom_call.1} parent=1 // loop_footer
      %s29 = sadd.s32 1, %s25
    $region7: #{tpu_custom_call.1} parent=1 // loop_footer_branch
      %24 = sbr.rel target = $region3
    $region8: #{tpu_custom_call.1} parent=1 // loop_exit
      _
    %1093 = vsyncpa [#allocation4], 1
    %s1094 = scalar_lea.sflag [#allocation4], 1
    %1095 = vsyncpa %s1094, 1
    %1096 = vsyncpa [#allocation7], 1
    %1097 = vsyncpa [#allocation10], 1
    %1098 = vsyncpa [#allocation5], 1
    %s1099 = scalar_lea.sflag [#allocation5], 1
    %1100 = vsyncpa %s1099, 1

</llo_original>
